<compile_context>
chip_gen: v7x
topology: tpu7x:2x2x1
jax: 0.10.0
libtpu: 0.0.40
codegen_flags: <defaults>
</compile_context>

<pallas_src>
import jax
import jax.numpy as jnp
from jax.experimental import pallas as pl
from jax.experimental.pallas import tpu as pltpu


def _round_up(x, m):
    return ((x + m - 1) // m) * m


def _layernorm_1pass(x, gamma, beta, eps=1e-5):
    # PyTorch nn.LayerNorm semantics (biased variance, eps inside the sqrt),
    # computed single-pass as E[x], E[x^2] to shave one VPU subtract per element.
    mu = jnp.mean(x, axis=-1, keepdims=True)
    ex2 = jnp.mean(x * x, axis=-1, keepdims=True)
    var = ex2 - mu * mu
    return (x - mu) * jax.lax.rsqrt(var + eps) * gamma + beta


def _finish(u, m, a, ln_ref, bias_ref, out_ref):
    # LayerNorms (dropout after user_norm is identity in eval mode).  The user
    # gamma/beta rows carry the folded 1/sqrt(D) scale, so the row-wise dot below
    # already equals  dot_product / sqrt(D)  of the reference.
    u = _layernorm_1pass(u, ln_ref[0:1, :], ln_ref[1:2, :])
    m = _layernorm_1pass(m, ln_ref[2:3, :], ln_ref[3:4, :])
    a = _layernorm_1pass(a, ln_ref[4:5, :], ln_ref[5:6, :])
    dot = jnp.sum(u * (m * a), axis=-1, keepdims=True)           # (tb, 1) XLU reduce
    pred_row = jnp.transpose(dot) + bias_ref[...]                 # lane-dense (1, tb)
    out_ref[...] = jnp.clip(pred_row, -0.1, 1.1)


def mf_fused_kernel(uid_ref, mid_ref, aid_ref, bias_ref,
                    ut_ref, mt_ref, at_ref, ln_ref, out_ref):
    """Fused-gather path: tables resident in VMEM, one-hot MXU gather per tile."""
    tb = uid_ref.shape[0]

    def gather(table_ref, ids):                                   # ids: (tb, 1) int32
        rows = table_ref.shape[0] // 2                            # [hi rows | lo rows]
        iota = jax.lax.broadcasted_iota(jnp.int32, (tb, rows), 1)
        onehot = (iota == ids).astype(jnp.float32)                # (tb, rows)
        hi = jnp.dot(onehot, table_ref[0:rows, :],
                     preferred_element_type=jnp.float32)
        lo = jnp.dot(onehot, table_ref[rows:, :],
                     preferred_element_type=jnp.float32)
        return hi + lo                                            # exact f32 rows

    # relu on raw embeddings (relu(relu(x)) == relu(x) for the user branch)
    u = jnp.maximum(gather(ut_ref, uid_ref[...]), 0.0)
    m = jnp.maximum(gather(mt_ref, mid_ref[...]), 0.0)
    a = jnp.maximum(gather(at_ref, aid_ref[...]), 0.0)
    _finish(u, m, a, ln_ref, bias_ref, out_ref)


def mf_gathered_kernel(u_ref, m_ref, a_ref, bias_ref, ln_ref, out_ref):
    """Fallback path: embeddings pre-gathered by XLA and streamed through VMEM."""
    u = jnp.maximum(u_ref[...], 0.0)
    m = jnp.maximum(m_ref[...], 0.0)
    a = jnp.maximum(a_ref[...], 0.0)
    _finish(u, m, a, ln_ref, bias_ref, out_ref)


def _stack_hi_lo(table, rows_pad):
    """Pad rows to a multiple of 8 and stack [bf16-representable hi ; f32 residual]."""
    t = jnp.pad(table, ((0, rows_pad - table.shape[0]), (0, 0)))
    hi = t.astype(jnp.bfloat16).astype(jnp.float32)
    return jnp.concatenate([hi, t - hi], axis=0)                  # (2*rows_pad, D)


def matrix_fact_forward(user_ids, movie_ids, age_bucket_ids, params, *, tb=2048):
    """Forward pass of matrix_fact (eval mode).  Returns predictions of shape (B,)."""
    B = user_ids.shape[0]
    D = params["user_factors"].shape[1]
    d_lanes = max(D, 128)                      # lane-padded width for VMEM estimates

    n_rows = [params["user_factors"].shape[0],
              params["movie_factors"].shape[0],
              params["age_factors"].shape[0]]
    rows_pad = [_round_up(r, 8) for r in n_rows]
    table_bytes = sum(2 * rp * D * 4 for rp in rows_pad)

    # Fused in-kernel gather only pays off while the tables sit comfortably in VMEM
    # and the per-sample one-hot matmul stays cheaper than re-streaming gathered rows.
    fuse = (max(rows_pad) <= 1024) and (table_bytes <= (4 << 20))

    # ---- batch tiling (lane-dense (1, tb) output blocks) ----
    tb_req = min(int(tb), 4096)
    if fuse:
        # keep each (tb, rows) one-hot intermediate under ~4 MiB of VMEM
        tb_cap = max(128, (((4 << 20) // (4 * max(rows_pad))) // 128) * 128)
        tb_req = min(tb_req, tb_cap)
    b8 = _round_up(B, 8)
    if b8 <= tb_req:
        tb_eff = b8                               # single tile covers padded batch
    else:
        tb_eff = max(128, (tb_req // 128) * 128)  # multi-tile: lane-aligned blocks
    B_pad = _round_up(B, tb_eff)
    num_tiles = B_pad // tb_eff
    pad = B_pad - B

    uid = jnp.pad(user_ids.astype(jnp.int32), (0, pad))
    mid = jnp.pad(movie_ids.astype(jnp.int32), (0, pad))
    aid = jnp.pad(age_bucket_ids.astype(jnp.int32), (0, pad))

    # Single lane-dense bias operand: user_bias + movie_bias + global_bias.
    bias_row = (params["user_bias"][uid][:, 0]
                + params["movie_bias"][mid][:, 0]
                + params["global_bias"][0, 0]).reshape(1, B_pad)

    # Stack the six LayerNorm rows into one (8, D) operand; fold 1/sqrt(D) into the
    # user branch so the kernel never multiplies by the scale explicitly.
    inv_sqrt_d = float(D) ** -0.5
    ln_stack = jnp.concatenate(
        [params["user_norm_gamma"] * inv_sqrt_d,
         params["user_norm_beta"] * inv_sqrt_d,
         params["movie_norm_gamma"], params["movie_norm_beta"],
         params["age_norm_gamma"], params["age_norm_beta"],
         jnp.zeros((2, D), jnp.float32)], axis=0)

    row_block = pl.BlockSpec((1, tb_eff), lambda i: (0, i))
    ln_block = pl.BlockSpec((8, D), lambda i: (0, 0))
    out_shape = jax.ShapeDtypeStruct((1, B_pad), jnp.float32)

    if fuse:
        ut = _stack_hi_lo(params["user_factors"], rows_pad[0])
        mt = _stack_hi_lo(params["movie_factors"], rows_pad[1])
        at = _stack_hi_lo(params["age_factors"], rows_pad[2])

        id_block = pl.BlockSpec((tb_eff, 1), lambda i: (i, 0))
        tbl_blocks = [pl.BlockSpec((2 * rp, D), lambda i: (0, 0)) for rp in rows_pad]

        vmem_est = (3 * 2 * (tb_eff // 8) * 4096          # (tb,1) id pipeline buffers
                    + 2 * sum(2 * rp * d_lanes * 4 for rp in rows_pad)   # tables
                    + 3 * 4 * tb_eff * max(rows_pad)       # one-hot scratch
                    + 8 * 4 * tb_eff * d_lanes             # gathered rows + LN temps
                    + (1 << 20))
        kernel = mf_fused_kernel
        in_specs = [id_block, id_block, id_block, row_block,
                    tbl_blocks[0], tbl_blocks[1], tbl_blocks[2], ln_block]
        operands = (uid.reshape(B_pad, 1), mid.reshape(B_pad, 1),
                    aid.reshape(B_pad, 1), bias_row, ut, mt, at, ln_stack)
    else:
        # TODO(synk): replace this XLA gather with an in-kernel, scalar-prefetch
        # indexed, double-buffered per-row DMA gather (and/or bf16 tables).
        u_emb = params["user_factors"][uid]                # (B_pad, D)
        m_emb = params["movie_factors"][mid]
        a_emb = params["age_factors"][aid]

        emb_block = pl.BlockSpec((tb_eff, D), lambda i: (i, 0))
        vmem_est = (3 * 2 * tb_eff * d_lanes * 4           # streamed embedding buffers
                    + 6 * tb_eff * d_lanes * 4             # live intermediates
                    + (1 << 20))
        kernel = mf_gathered_kernel
        in_specs = [emb_block, emb_block, emb_block, row_block, ln_block]
        operands = (u_emb, m_emb, a_emb, bias_row, ln_stack)

    cp_kwargs = dict(dimension_semantics=("parallel",))
    if vmem_est > (12 << 20):
        # Raise the scoped-VMEM limit, but cap at 32 MiB so the working set also
        # fits v7x's 64 MiB physical VMEM with headroom for compiler scratch.
        cp_kwargs["vmem_limit_bytes"] = int(min(max(vmem_est, 24 << 20), 32 << 20))

    out = pl.pallas_call(
        kernel,
        out_shape=out_shape,
        grid_spec=pltpu.PrefetchScalarGridSpec(
            num_scalar_prefetch=0,
            grid=(num_tiles,),
            in_specs=in_specs,
            out_specs=row_block,
        ),
        compiler_params=pltpu.CompilerParams(**cp_kwargs),
    )(*operands)
    return out[0, :B]


def init_params(key, n_users, n_movies, n_age_buckets, n_factors):
    """Deterministic parameter init mirroring matrix_fact.__init__."""
    ks = jax.random.split(key, 5)

    def xavier_normal(k, shape):
        fan_in, fan_out = shape[0], shape[1]
        std = jnp.sqrt(2.0 / (fan_in + fan_out))
        return jax.random.normal(k, shape, dtype=jnp.float32) * std

    return {
        "user_factors": xavier_normal(ks[0], (n_users, n_factors)),
        "movie_factors": xavier_normal(ks[1], (n_movies, n_factors)),
        "age_factors": xavier_normal(ks[2], (n_age_buckets, n_factors)),
        # nn.Embedding default init is N(0, 1)
        "user_bias": jax.random.normal(ks[3], (n_users, 1), dtype=jnp.float32),
        "movie_bias": jax.random.normal(ks[4], (n_movies, 1), dtype=jnp.float32),
        # nn.LayerNorm defaults: weight=1, bias=0
        "user_norm_gamma": jnp.ones((1, n_factors), jnp.float32),
        "user_norm_beta": jnp.zeros((1, n_factors), jnp.float32),
        "movie_norm_gamma": jnp.ones((1, n_factors), jnp.float32),
        "movie_norm_beta": jnp.zeros((1, n_factors), jnp.float32),
        "age_norm_gamma": jnp.ones((1, n_factors), jnp.float32),
        "age_norm_beta": jnp.zeros((1, n_factors), jnp.float32),
        "global_bias": jnp.zeros((1, 1), jnp.float32),
    }


def _layernorm_ref(x, gamma, beta, eps=1e-5):
    mu = jnp.mean(x, axis=-1, keepdims=True)
    var = jnp.mean((x - mu) ** 2, axis=-1, keepdims=True)
    return (x - mu) * jax.lax.rsqrt(var + eps) * gamma + beta


def reference_forward(user_ids, movie_ids, age_bucket_ids, params):
    """Pure-JAX reference matching the PyTorch forward (eval mode)."""
    u = jax.nn.relu(params["user_factors"][user_ids])
    m = jax.nn.relu(params["movie_factors"][movie_ids])
    a = jax.nn.relu(params["age_factors"][age_bucket_ids])
    u = _layernorm_ref(u, params["user_norm_gamma"], params["user_norm_beta"])
    m = _layernorm_ref(m, params["movie_norm_gamma"], params["movie_norm_beta"])
    a = _layernorm_ref(a, params["age_norm_gamma"], params["age_norm_beta"])
    ub = params["user_bias"][user_ids][:, 0]
    mb = params["movie_bias"][movie_ids][:, 0]
    dot = jnp.sum(u * (m * a), axis=1)
    pred = dot / jnp.sqrt(jnp.float32(u.shape[1]))
    pred = pred + ub + mb + params["global_bias"][0, 0]
    return jnp.clip(pred, -0.1, 1.1)


if __name__ == "__main__":
    key = jax.random.PRNGKey(0)
    fwd = jax.jit(matrix_fact_forward, static_argnames=("tb",))

    # (n_users, n_movies, n_age_buckets, n_factors, batch, tb)
    configs = [
        (16, 32, 10, 128, 8, 2048),     # tiny batch, fused gather, single grid step
        (64, 128, 12, 128, 300, 128),   # ragged batch, fused gather, multi-tile output
        (20, 40, 8, 100, 37, 2048),     # PyTorch default n_factors=100 (non-128 lanes)
        (3000, 64, 8, 64, 257, 2048),   # large user table -> XLA-gather fallback path
    ]

    for cfg_i, (nu, nm, na, nf, batch, tb) in enumerate(configs):
        k_cfg = jax.random.fold_in(key, cfg_i)
        k_params, k_u, k_m, k_a = jax.random.split(k_cfg, 4)

        params = init_params(k_params, nu, nm, na, nf)
        user_ids = jax.random.randint(k_u, (batch,), 0, nu, dtype=jnp.int32)
        movie_ids = jax.random.randint(k_m, (batch,), 0, nm, dtype=jnp.int32)
        age_ids = jax.random.randint(k_a, (batch,), 0, na, dtype=jnp.int32)

        preds = fwd(user_ids, movie_ids, age_ids, params, tb=tb)
        preds = jax.block_until_ready(preds)

        ref = reference_forward(user_ids, movie_ids, age_ids, params)
        assert preds.shape == (batch,), preds.shape
        assert jnp.allclose(preds, ref, atol=5e-4, rtol=5e-4), (
            cfg_i, float(jnp.max(jnp.abs(preds - ref))))

    print("KERNEL_OK")
</pallas_src>

<mosaic_0001>
module attributes {stable_mosaic.version = 11 : i64} {
  func.func @mf_fused_kernel(%arg0: i32, %arg1: memref<8x1xi32, #tpu.memory_space<vmem>>, %arg2: memref<8x1xi32, #tpu.memory_space<vmem>>, %arg3: memref<8x1xi32, #tpu.memory_space<vmem>>, %arg4: memref<1x8xf32, #tpu.memory_space<vmem>>, %arg5: memref<32x128xf32, #tpu.memory_space<vmem>>, %arg6: memref<64x128xf32, #tpu.memory_space<vmem>>, %arg7: memref<32x128xf32, #tpu.memory_space<vmem>>, %arg8: memref<8x128xf32, #tpu.memory_space<vmem>>, %arg9: memref<1x8xf32, #tpu.memory_space<vmem>>) attributes {dimension_semantics = [#tpu.dimension_semantics<parallel>], iteration_bounds = array<i64: 1>, scalar_prefetch = 0 : i64, scratch_operands = 0 : i64, tpu.core_type = #tpu.core_type<tc>, window_params = [{transform_indices = @transform_0, window_bounds = array<i64: 8, 1>}, {transform_indices = @transform_1, window_bounds = array<i64: 8, 1>}, {transform_indices = @transform_2, window_bounds = array<i64: 8, 1>}, {transform_indices = @transform_3, window_bounds = array<i64: 1, 8>}, {pipeline_mode = #tpu.pipeline_mode<synchronous>, transform_indices = @transform_4, window_bounds = array<i64: 32, 128>}, {pipeline_mode = #tpu.pipeline_mode<synchronous>, transform_indices = @transform_5, window_bounds = array<i64: 64, 128>}, {pipeline_mode = #tpu.pipeline_mode<synchronous>, transform_indices = @transform_6, window_bounds = array<i64: 32, 128>}, {pipeline_mode = #tpu.pipeline_mode<synchronous>, transform_indices = @transform_7, window_bounds = array<i64: 8, 128>}, {transform_indices = @transform_8, window_bounds = array<i64: 1, 8>}]} {
    %c0 = arith.constant 0 : index
    %c0_0 = arith.constant 0 : index
    %0 = vector.load %arg1[%c0, %c0_0] : memref<8x1xi32, #tpu.memory_space<vmem>>, vector<8x1xi32>
    %1 = tpu.iota {dimensions = array<i32: 1>} : vector<8x16xi32>
    %2 = vector.broadcast %0 : vector<8x1xi32> to vector<8x16xi32>
    %3 = arith.cmpi eq, %1, %2 : vector<8x16xi32>
    %4 = arith.extui %3 : vector<8x16xi1> to vector<8x16xi32>
    %5 = arith.sitofp %4 : vector<8x16xi32> to vector<8x16xf32>
    %c0_1 = arith.constant 0 : index
    %c0_2 = arith.constant 0 : index
    %6 = vector.load %arg5[%c0_1, %c0_2] : memref<32x128xf32, #tpu.memory_space<vmem>>, vector<16x128xf32>
    %cst = arith.constant dense<0.000000e+00> : vector<8x128xf32>
    %7 = tpu.matmul %5, %6, %cst {dimension_numbers = #tpu.dot_dimension_numbers<[1], [0], [0], [1], [0, 0, 1, 1], [], []>} : vector<8x16xf32>, vector<16x128xf32>, vector<8x128xf32> -> vector<8x128xf32>
    %c16 = arith.constant 16 : index
    %c0_3 = arith.constant 0 : index
    %8 = vector.load %arg5[%c16, %c0_3] : memref<32x128xf32, #tpu.memory_space<vmem>>, vector<16x128xf32>
    %cst_4 = arith.constant dense<0.000000e+00> : vector<8x128xf32>
    %9 = tpu.matmul %5, %8, %cst_4 {dimension_numbers = #tpu.dot_dimension_numbers<[1], [0], [0], [1], [0, 0, 1, 1], [], []>} : vector<8x16xf32>, vector<16x128xf32>, vector<8x128xf32> -> vector<8x128xf32>
    %10 = arith.addf %7, %9 : vector<8x128xf32>
    %cst_5 = arith.constant 0.000000e+00 : f32
    %11 = vector.broadcast %cst_5 : f32 to vector<8x128xf32>
    %12 = arith.maximumf %10, %11 : vector<8x128xf32>
    %c0_6 = arith.constant 0 : index
    %c0_7 = arith.constant 0 : index
    %13 = vector.load %arg2[%c0_6, %c0_7] : memref<8x1xi32, #tpu.memory_space<vmem>>, vector<8x1xi32>
    %14 = tpu.iota {dimensions = array<i32: 1>} : vector<8x32xi32>
    %15 = vector.broadcast %13 : vector<8x1xi32> to vector<8x32xi32>
    %16 = arith.cmpi eq, %14, %15 : vector<8x32xi32>
    %17 = arith.extui %16 : vector<8x32xi1> to vector<8x32xi32>
    %18 = arith.sitofp %17 : vector<8x32xi32> to vector<8x32xf32>
    %c0_8 = arith.constant 0 : index
    %c0_9 = arith.constant 0 : index
    %19 = vector.load %arg6[%c0_8, %c0_9] : memref<64x128xf32, #tpu.memory_space<vmem>>, vector<32x128xf32>
    %cst_10 = arith.constant dense<0.000000e+00> : vector<8x128xf32>
    %20 = tpu.matmul %18, %19, %cst_10 {dimension_numbers = #tpu.dot_dimension_numbers<[1], [0], [0], [1], [0, 0, 1, 1], [], []>} : vector<8x32xf32>, vector<32x128xf32>, vector<8x128xf32> -> vector<8x128xf32>
    %c32 = arith.constant 32 : index
    %c0_11 = arith.constant 0 : index
    %21 = vector.load %arg6[%c32, %c0_11] : memref<64x128xf32, #tpu.memory_space<vmem>>, vector<32x128xf32>
    %cst_12 = arith.constant dense<0.000000e+00> : vector<8x128xf32>
    %22 = tpu.matmul %18, %21, %cst_12 {dimension_numbers = #tpu.dot_dimension_numbers<[1], [0], [0], [1], [0, 0, 1, 1], [], []>} : vector<8x32xf32>, vector<32x128xf32>, vector<8x128xf32> -> vector<8x128xf32>
    %23 = arith.addf %20, %22 : vector<8x128xf32>
    %cst_13 = arith.constant 0.000000e+00 : f32
    %24 = vector.broadcast %cst_13 : f32 to vector<8x128xf32>
    %25 = arith.maximumf %23, %24 : vector<8x128xf32>
    %c0_14 = arith.constant 0 : index
    %c0_15 = arith.constant 0 : index
    %26 = vector.load %arg3[%c0_14, %c0_15] : memref<8x1xi32, #tpu.memory_space<vmem>>, vector<8x1xi32>
    %27 = tpu.iota {dimensions = array<i32: 1>} : vector<8x16xi32>
    %28 = vector.broadcast %26 : vector<8x1xi32> to vector<8x16xi32>
    %29 = arith.cmpi eq, %27, %28 : vector<8x16xi32>
    %30 = arith.extui %29 : vector<8x16xi1> to vector<8x16xi32>
    %31 = arith.sitofp %30 : vector<8x16xi32> to vector<8x16xf32>
    %c0_16 = arith.constant 0 : index
    %c0_17 = arith.constant 0 : index
    %32 = vector.load %arg7[%c0_16, %c0_17] : memref<32x128xf32, #tpu.memory_space<vmem>>, vector<16x128xf32>
    %cst_18 = arith.constant dense<0.000000e+00> : vector<8x128xf32>
    %33 = tpu.matmul %31, %32, %cst_18 {dimension_numbers = #tpu.dot_dimension_numbers<[1], [0], [0], [1], [0, 0, 1, 1], [], []>} : vector<8x16xf32>, vector<16x128xf32>, vector<8x128xf32> -> vector<8x128xf32>
    %c16_19 = arith.constant 16 : index
    %c0_20 = arith.constant 0 : index
    %34 = vector.load %arg7[%c16_19, %c0_20] : memref<32x128xf32, #tpu.memory_space<vmem>>, vector<16x128xf32>
    %cst_21 = arith.constant dense<0.000000e+00> : vector<8x128xf32>
    %35 = tpu.matmul %31, %34, %cst_21 {dimension_numbers = #tpu.dot_dimension_numbers<[1], [0], [0], [1], [0, 0, 1, 1], [], []>} : vector<8x16xf32>, vector<16x128xf32>, vector<8x128xf32> -> vector<8x128xf32>
    %36 = arith.addf %33, %35 : vector<8x128xf32>
    %cst_22 = arith.constant 0.000000e+00 : f32
    %37 = vector.broadcast %cst_22 : f32 to vector<8x128xf32>
    %38 = arith.maximumf %36, %37 : vector<8x128xf32>
    %c0_23 = arith.constant 0 : index
    %c0_24 = arith.constant 0 : index
    %39 = vector.load %arg8[%c0_23, %c0_24] : memref<8x128xf32, #tpu.memory_space<vmem>>, vector<1x128xf32>
    %c1 = arith.constant 1 : index
    %c0_25 = arith.constant 0 : index
    %40 = vector.load %arg8[%c1, %c0_25] : memref<8x128xf32, #tpu.memory_space<vmem>>, vector<1x128xf32>
    %cst_26 = arith.constant dense<0.000000e+00> : vector<8xf32>
    %41 = vector.multi_reduction <add>, %12, %cst_26 [1] : vector<8x128xf32> to vector<8xf32>
    %42 = vector.shape_cast %41 : vector<8xf32> to vector<8x1xf32>
    %cst_27 = arith.constant 1.280000e+02 : f32
    %43 = vector.broadcast %cst_27 : f32 to vector<8x1xf32>
    %44 = arith.divf %42, %43 : vector<8x1xf32>
    %45 = arith.mulf %12, %12 : vector<8x128xf32>
    %cst_28 = arith.constant dense<0.000000e+00> : vector<8xf32>
    %46 = vector.multi_reduction <add>, %45, %cst_28 [1] : vector<8x128xf32> to vector<8xf32>
    %47 = vector.shape_cast %46 : vector<8xf32> to vector<8x1xf32>
    %cst_29 = arith.constant 1.280000e+02 : f32
    %48 = vector.broadcast %cst_29 : f32 to vector<8x1xf32>
    %49 = arith.divf %47, %48 : vector<8x1xf32>
    %50 = arith.mulf %44, %44 : vector<8x1xf32>
    %51 = arith.subf %49, %50 : vector<8x1xf32>
    %52 = vector.broadcast %44 : vector<8x1xf32> to vector<8x128xf32>
    %53 = arith.subf %12, %52 : vector<8x128xf32>
    %cst_30 = arith.constant 9.99999974E-6 : f32
    %54 = vector.broadcast %cst_30 : f32 to vector<8x1xf32>
    %55 = arith.addf %51, %54 : vector<8x1xf32>
    %56 = math.rsqrt %55 : vector<8x1xf32>
    %57 = vector.broadcast %56 : vector<8x1xf32> to vector<8x128xf32>
    %58 = arith.mulf %53, %57 : vector<8x128xf32>
    %59 = vector.broadcast %39 : vector<1x128xf32> to vector<8x128xf32>
    %60 = arith.mulf %58, %59 : vector<8x128xf32>
    %61 = vector.broadcast %40 : vector<1x128xf32> to vector<8x128xf32>
    %62 = arith.addf %60, %61 : vector<8x128xf32>
    %c2 = arith.constant 2 : index
    %c0_31 = arith.constant 0 : index
    %63 = vector.load %arg8[%c2, %c0_31] : memref<8x128xf32, #tpu.memory_space<vmem>>, vector<1x128xf32>
    %c3 = arith.constant 3 : index
    %c0_32 = arith.constant 0 : index
    %64 = vector.load %arg8[%c3, %c0_32] : memref<8x128xf32, #tpu.memory_space<vmem>>, vector<1x128xf32>
    %cst_33 = arith.constant dense<0.000000e+00> : vector<8xf32>
    %65 = vector.multi_reduction <add>, %25, %cst_33 [1] : vector<8x128xf32> to vector<8xf32>
    %66 = vector.shape_cast %65 : vector<8xf32> to vector<8x1xf32>
    %cst_34 = arith.constant 1.280000e+02 : f32
    %67 = vector.broadcast %cst_34 : f32 to vector<8x1xf32>
    %68 = arith.divf %66, %67 : vector<8x1xf32>
    %69 = arith.mulf %25, %25 : vector<8x128xf32>
    %cst_35 = arith.constant dense<0.000000e+00> : vector<8xf32>
    %70 = vector.multi_reduction <add>, %69, %cst_35 [1] : vector<8x128xf32> to vector<8xf32>
    %71 = vector.shape_cast %70 : vector<8xf32> to vector<8x1xf32>
    %cst_36 = arith.constant 1.280000e+02 : f32
    %72 = vector.broadcast %cst_36 : f32 to vector<8x1xf32>
    %73 = arith.divf %71, %72 : vector<8x1xf32>
    %74 = arith.mulf %68, %68 : vector<8x1xf32>
    %75 = arith.subf %73, %74 : vector<8x1xf32>
    %76 = vector.broadcast %68 : vector<8x1xf32> to vector<8x128xf32>
    %77 = arith.subf %25, %76 : vector<8x128xf32>
    %cst_37 = arith.constant 9.99999974E-6 : f32
    %78 = vector.broadcast %cst_37 : f32 to vector<8x1xf32>
    %79 = arith.addf %75, %78 : vector<8x1xf32>
    %80 = math.rsqrt %79 : vector<8x1xf32>
    %81 = vector.broadcast %80 : vector<8x1xf32> to vector<8x128xf32>
    %82 = arith.mulf %77, %81 : vector<8x128xf32>
    %83 = vector.broadcast %63 : vector<1x128xf32> to vector<8x128xf32>
    %84 = arith.mulf %82, %83 : vector<8x128xf32>
    %85 = vector.broadcast %64 : vector<1x128xf32> to vector<8x128xf32>
    %86 = arith.addf %84, %85 : vector<8x128xf32>
    %c4 = arith.constant 4 : index
    %c0_38 = arith.constant 0 : index
    %87 = vector.load %arg8[%c4, %c0_38] : memref<8x128xf32, #tpu.memory_space<vmem>>, vector<1x128xf32>
    %c5 = arith.constant 5 : index
    %c0_39 = arith.constant 0 : index
    %88 = vector.load %arg8[%c5, %c0_39] : memref<8x128xf32, #tpu.memory_space<vmem>>, vector<1x128xf32>
    %cst_40 = arith.constant dense<0.000000e+00> : vector<8xf32>
    %89 = vector.multi_reduction <add>, %38, %cst_40 [1] : vector<8x128xf32> to vector<8xf32>
    %90 = vector.shape_cast %89 : vector<8xf32> to vector<8x1xf32>
    %cst_41 = arith.constant 1.280000e+02 : f32
    %91 = vector.broadcast %cst_41 : f32 to vector<8x1xf32>
    %92 = arith.divf %90, %91 : vector<8x1xf32>
    %93 = arith.mulf %38, %38 : vector<8x128xf32>
    %cst_42 = arith.constant dense<0.000000e+00> : vector<8xf32>
    %94 = vector.multi_reduction <add>, %93, %cst_42 [1] : vector<8x128xf32> to vector<8xf32>
    %95 = vector.shape_cast %94 : vector<8xf32> to vector<8x1xf32>
    %cst_43 = arith.constant 1.280000e+02 : f32
    %96 = vector.broadcast %cst_43 : f32 to vector<8x1xf32>
    %97 = arith.divf %95, %96 : vector<8x1xf32>
    %98 = arith.mulf %92, %92 : vector<8x1xf32>
    %99 = arith.subf %97, %98 : vector<8x1xf32>
    %100 = vector.broadcast %92 : vector<8x1xf32> to vector<8x128xf32>
    %101 = arith.subf %38, %100 : vector<8x128xf32>
    %cst_44 = arith.constant 9.99999974E-6 : f32
    %102 = vector.broadcast %cst_44 : f32 to vector<8x1xf32>
    %103 = arith.addf %99, %102 : vector<8x1xf32>
    %104 = math.rsqrt %103 : vector<8x1xf32>
    %105 = vector.broadcast %104 : vector<8x1xf32> to vector<8x128xf32>
    %106 = arith.mulf %101, %105 : vector<8x128xf32>
    %107 = vector.broadcast %87 : vector<1x128xf32> to vector<8x128xf32>
    %108 = arith.mulf %106, %107 : vector<8x128xf32>
    %109 = vector.broadcast %88 : vector<1x128xf32> to vector<8x128xf32>
    %110 = arith.addf %108, %109 : vector<8x128xf32>
    %111 = arith.mulf %86, %110 : vector<8x128xf32>
    %112 = arith.mulf %62, %111 : vector<8x128xf32>
    %cst_45 = arith.constant dense<0.000000e+00> : vector<8xf32>
    %113 = vector.multi_reduction <add>, %112, %cst_45 [1] : vector<8x128xf32> to vector<8xf32>
    %114 = vector.shape_cast %113 : vector<8xf32> to vector<8x1xf32>
    %115 = tpu.transpose %114, [1, 0] : vector<8x1xf32> -> vector<1x8xf32>
    %c0_46 = arith.constant 0 : index
    %c0_47 = arith.constant 0 : index
    %116 = vector.load %arg4[%c0_46, %c0_47] : memref<1x8xf32, #tpu.memory_space<vmem>>, vector<1x8xf32>
    %117 = arith.addf %115, %116 : vector<1x8xf32>
    %cst_48 = arith.constant -1.000000e-01 : f32
    %cst_49 = arith.constant 1.100000e+00 : f32
    %118 = vector.broadcast %cst_48 : f32 to vector<1x8xf32>
    %119 = arith.maximumf %118, %117 : vector<1x8xf32>
    %120 = vector.broadcast %cst_49 : f32 to vector<1x8xf32>
    %121 = arith.minimumf %120, %119 : vector<1x8xf32>
    %c0_50 = arith.constant 0 : index
    %c0_51 = arith.constant 0 : index
    %122 = vector.load %arg9[%c0_50, %c0_51] : memref<1x8xf32, #tpu.memory_space<vmem>>, vector<1x8xf32>
    tpu.vector_store %arg9[%c0_50, %c0_51], %121 {strides = array<i32>} : memref<1x8xf32, #tpu.memory_space<vmem>>, vector<1x8xf32>,
    return
  }
  func.func @transform_0(%arg0: i32) -> (i32, i32) {
    %c0_i32 = arith.constant 0 : i32
    %c0_i32_0 = arith.constant 0 : i32
    return %arg0, %c0_i32 : i32, i32
  }
  func.func @transform_1(%arg0: i32) -> (i32, i32) {
    %c0_i32 = arith.constant 0 : i32
    %c0_i32_0 = arith.constant 0 : i32
    return %arg0, %c0_i32 : i32, i32
  }
  func.func @transform_2(%arg0: i32) -> (i32, i32) {
    %c0_i32 = arith.constant 0 : i32
    %c0_i32_0 = arith.constant 0 : i32
    return %arg0, %c0_i32 : i32, i32
  }
  func.func @transform_3(%arg0: i32) -> (i32, i32) {
    %c0_i32 = arith.constant 0 : i32
    %c0_i32_0 = arith.constant 0 : i32
    return %c0_i32, %arg0 : i32, i32
  }
  func.func @transform_4(%arg0: i32) -> (i32, i32) {
    %c0_i32 = arith.constant 0 : i32
    %c0_i32_0 = arith.constant 0 : i32
    %c0_i32_1 = arith.constant 0 : i32
    return %c0_i32, %c0_i32_0 : i32, i32
  }
  func.func @transform_5(%arg0: i32) -> (i32, i32) {
    %c0_i32 = arith.constant 0 : i32
    %c0_i32_0 = arith.constant 0 : i32
    %c0_i32_1 = arith.constant 0 : i32
    return %c0_i32, %c0_i32_0 : i32, i32
  }
  func.func @transform_6(%arg0: i32) -> (i32, i32) {
    %c0_i32 = arith.constant 0 : i32
    %c0_i32_0 = arith.constant 0 : i32
    %c0_i32_1 = arith.constant 0 : i32
    return %c0_i32, %c0_i32_0 : i32, i32
  }
  func.func @transform_7(%arg0: i32) -> (i32, i32) {
    %c0_i32 = arith.constant 0 : i32
    %c0_i32_0 = arith.constant 0 : i32
    %c0_i32_1 = arith.constant 0 : i32
    return %c0_i32, %c0_i32_0 : i32, i32
  }
  func.func @transform_8(%arg0: i32) -> (i32, i32) {
    %c0_i32 = arith.constant 0 : i32
    %c0_i32_0 = arith.constant 0 : i32
    return %c0_i32, %arg0 : i32, i32
  }
}

</mosaic_0001>

<llo_original>
// kernel: matrix_fact_forward.1
$region0: #{matrix_fact_forward.1}
  #allocation0 [shape = 'u32[]', space=smem, size = 0x4, offset = 0x4, fixed_abs, tag = 'smem constant byte address 0x4 - core index']
  #allocation1 [shape = 'u32[144,128]{1,0:T(1,128)}', space=vmem, size = 0x12000, scoped, tag = 'internal scratch']
  %s0 = inlined_call_operand.vmem [shape: s32[8,1], index: 0, kind: input, shape index: {}]
  %s1 = inlined_call_operand.vmem [shape: s32[8,1], index: 1, kind: input, shape index: {}]
  %s2 = inlined_call_operand.vmem [shape: s32[8,1], index: 2, kind: input, shape index: {}]
  %s3 = inlined_call_operand.vmem [shape: f32[1,8], index: 3, kind: input, shape index: {}]
  %s4 = inlined_call_operand.vmem [shape: f32[32,128], index: 4, kind: input, shape index: {}]
  %s5 = inlined_call_operand.vmem [shape: f32[64,128], index: 5, kind: input, shape index: {}]
  %s6 = inlined_call_operand.vmem [shape: f32[32,128], index: 6, kind: input, shape index: {}]
  %s7 = inlined_call_operand.vmem [shape: f32[8,128], index: 7, kind: input, shape index: {}]
  %s8 = inlined_call_operand.hbm [shape: f32[1,8], index: 8, kind: output, shape index: {}]
  %s9 = sld [smem:[#allocation0]]
  $region42: #{matrix_fact_forward.1} parent=0
    _
  %s11 = ssub.s32 1, %s9
  %s12 = scalar_select 0, %s11, %s9
  $region1: #{matrix_fact_forward.1} parent=0
    #allocation2 [shape = 'u8[512]{0}', space=vmem, size = 0x400, scoped, tag = 'output window, operand 0, single buffered']
    #allocation3 [shape = 's32[1]{0}', space=sflag, size = 0x4, scoped, tag = 'scoped memory for matrix_fact_forward.1']
    %13 = vsyncpa [#allocation3], 0
    // Predicated region
    $region2: #{matrix_fact_forward.1} parent=1 // pred_check
      _
    $region3: #{matrix_fact_forward.1} parent=1 // pred_check_branch
      %15 = sbr.rel (0) target = $region5
    $region4: #{matrix_fact_forward.1} parent=1 // pred_region
      _
    $region5: #{matrix_fact_forward.1} parent=1 // pred_fallthru
      _
    // Predicated region
    $region6: #{matrix_fact_forward.1} parent=1 // pred_check
      _
    $region7: #{matrix_fact_forward.1} parent=1 // pred_check_branch
      %17 = sbr.rel (0) target = $region9
    $region8: #{matrix_fact_forward.1} parent=1 // pred_region
      _
    $region9: #{matrix_fact_forward.1} parent=1 // pred_fallthru
      _
    // Predicated region
    $region10: #{matrix_fact_forward.1} parent=1 // pred_check
      _
    $region11: #{matrix_fact_forward.1} parent=1 // pred_check_branch
      %19 = sbr.rel (0) target = $region13
    $region12: #{matrix_fact_forward.1} parent=1 // pred_region
      _
    $region13: #{matrix_fact_forward.1} parent=1 // pred_fallthru
      _
    // Predicated region
    $region14: #{matrix_fact_forward.1} parent=1 // pred_check
      _
    $region15: #{matrix_fact_forward.1} parent=1 // pred_check_branch
      %21 = sbr.rel (0) target = $region17
    $region16: #{matrix_fact_forward.1} parent=1 // pred_region
      _
    $region17: #{matrix_fact_forward.1} parent=1 // pred_fallthru
      _
    // Predicated region
    $region18: #{matrix_fact_forward.1} parent=1 // pred_check
      _
    $region19: #{matrix_fact_forward.1} parent=1 // pred_check_branch
      %23 = sbr.rel (0) target = $region21
    $region20: #{matrix_fact_forward.1} parent=1 // pred_region
      _
    $region21: #{matrix_fact_forward.1} parent=1 // pred_fallthru
      _
    // Predicated region
    $region22: #{matrix_fact_forward.1} parent=1 // pred_check
      _
    $region23: #{matrix_fact_forward.1} parent=1 // pred_check_branch
      %25 = sbr.rel (0) target = $region25
    $region24: #{matrix_fact_forward.1} parent=1 // pred_region
      _
    $region25: #{matrix_fact_forward.1} parent=1 // pred_fallthru
      _
    // Predicated region
    $region26: #{matrix_fact_forward.1} parent=1 // pred_check
      _
    $region27: #{matrix_fact_forward.1} parent=1 // pred_check_branch
      %27 = sbr.rel (0) target = $region29
    $region28: #{matrix_fact_forward.1} parent=1 // pred_region
      _
    $region29: #{matrix_fact_forward.1} parent=1 // pred_fallthru
      _
    // Predicated region
    $region30: #{matrix_fact_forward.1} parent=1 // pred_check
      _
    $region31: #{matrix_fact_forward.1} parent=1 // pred_check_branch
      %29 = sbr.rel (0) target = $region33
    $region32: #{matrix_fact_forward.1} parent=1 // pred_region
      _
    $region33: #{matrix_fact_forward.1} parent=1 // pred_fallthru
      _
    %v30 = vld [vmem:[%s0] sm:$0xff]
    %v31 = vlaneseq
    %v32 = vand.u32 %v31, 127
    %33 = vset.pattern.permute.xlu0 0
    %34 = vperm.xlu0 %33, %v30
    %v35 = vpop.permute.xlu0 %34
    %vm36 = vcmp.eq.s32.totalorder %v32, %v35
    %v37 = vsel %vm36, 1, 0
    %v38 = vcvt.s32.f32 %v37
    %v39 = vld [vmem:[%s4] sm:$0xff]
    %v40 = vld [vmem:[%s4 + $0x8] sm:$0xff]
    %v41 = vld [vmem:[%s4 + $0x10] sm:$0xff]
    %v42 = vld [vmem:[%s4 + $0x18] sm:$0xff]
    %vm43 = vcmask 130048
    %v45 = vsel %vm43, %v38, 0
    %47 = vmatprep.subr.mxu0 0.0
    %48 = vmatpush1.msra.mxu0 %v41
    %49 = vmatprep.subr.mxu0 0.0
    %50 = vmatpush1.msra.mxu0 %v42
    %51 = vmatprep.subr.mxu0 0.0
    %52 = vmatpush1.msra.mxu0 0.0
    %53 = vmatprep.subr.mxu0 0.0
    %54 = vmatpush1.msra.mxu0 0.0
    %55 = vmatprep.subr.mxu0 0.0
    %56 = vmatpush1.msra.mxu0 0.0
    %57 = vmatprep.subr.mxu0 0.0
    %58 = vmatpush1.msra.mxu0 0.0
    %59 = vmatprep.subr.mxu0 0.0
    %60 = vmatpush1.msra.mxu0 0.0
    %61 = vmatprep.subr.mxu0 0.0
    %62 = vmatpush1.msra.mxu0 0.0
    %63 = vmatprep.subr.mxu0 0.0
    %64 = vmatpush1.msra.mxu0 0.0
    %65 = vmatprep.subr.mxu0 0.0
    %66 = vmatpush1.msra.mxu0 0.0
    %67 = vmatprep.subr.mxu0 0.0
    %68 = vmatpush1.msra.mxu0 0.0
    %69 = vmatprep.subr.mxu0 0.0
    %70 = vmatpush1.msra.mxu0 0.0
    %71 = vmatprep.subr.mxu0 0.0
    %72 = vmatpush1.msra.mxu0 0.0
    %73 = vmatprep.subr.mxu0 0.0
    %74 = vmatpush1.msra.mxu0 0.0
    %75 = vmatprep.subr.mxu0 0.0
    %76 = vmatpush1.msra.mxu0 0.0
    %77 = vmatprep.subr.mxu0 0.0
    %78 = vmatpush1.msra.mxu0 0.0
    %79 = vmatprep.subr.mxu0 0.0
    %80 = vmatpush1.msra.mxu0 0.0
    %81 = vmatprep.subr.mxu0 0.0
    %82 = vmatpush1.msra.mxu0 0.0
    %83 = vmatprep.subr.mxu0 0.0
    %84 = vmatpush1.msra.mxu0 0.0
    %85 = vmatprep.subr.mxu0 0.0
    %86 = vmatpush1.msra.mxu0 0.0
    %87 = vmatprep.subr.mxu0 0.0
    %88 = vmatpush1.msra.mxu0 0.0
    %89 = vmatprep.subr.mxu0 0.0
    %90 = vmatpush1.msra.mxu0 0.0
    %91 = vmatprep.subr.mxu0 0.0
    %92 = vmatpush1.msra.mxu0 0.0
    %93 = vmatprep.subr.mxu0 0.0
    %94 = vmatpush1.msra.mxu0 0.0
    %95 = vmatprep.subr.mxu0 0.0
    %96 = vmatpush1.msra.mxu0 0.0
    %97 = vmatprep.subr.mxu0 0.0
    %98 = vmatpush1.msra.mxu0 0.0
    %99 = vmatprep.subr.mxu0 0.0
    %100 = vmatpush1.msra.mxu0 0.0
    %101 = vmatprep.subr.mxu0 0.0
    %102 = vmatpush1.msra.mxu0 0.0
    %103 = vmatprep.subr.mxu0 0.0
    %104 = vmatpush1.msra.mxu0 0.0
    %105 = vmatprep.subr.mxu0 0.0
    %106 = vmatpush1.msra.mxu0 0.0
    %107 = vmatprep.subr.mxu0 0.0
    %108 = vmatpush1.msra.mxu0 0.0
    %109 = vmatprep.subr.mxu0 0.0
    %110 = vmatpush1.msra.mxu0 0.0
    %111 = vmatprep.mubr.f32.mxu0 0.0
    %112 = vmatmul.mubr.f32.gmra.mrb[0].mxu0 %v45
    %v113 = vpop.f32.mrb[0].mxu0
    %v114 = vadd.f32 0.0, %v113
    %v115 = vpop.f32.mrb[0].mxu0
    %116 = vdwg.mxu0
    %117 = vmatprep.subr.mxu0 0.0
    %118 = vmatpush1.msra.mxu0 %v39
    %119 = vmatprep.subr.mxu0 0.0
    %120 = vmatpush1.msra.mxu0 %v40
    %121 = vmatprep.subr.mxu0 0.0
    %122 = vmatpush1.msra.mxu0 0.0
    %123 = vmatprep.subr.mxu0 0.0
    %124 = vmatpush1.msra.mxu0 0.0
    %125 = vmatprep.subr.mxu0 0.0
    %126 = vmatpush1.msra.mxu0 0.0
    %127 = vmatprep.subr.mxu0 0.0
    %128 = vmatpush1.msra.mxu0 0.0
    %129 = vmatprep.subr.mxu0 0.0
    %130 = vmatpush1.msra.mxu0 0.0
    %131 = vmatprep.subr.mxu0 0.0
    %132 = vmatpush1.msra.mxu0 0.0
    %133 = vmatprep.subr.mxu0 0.0
    %134 = vmatpush1.msra.mxu0 0.0
    %135 = vmatprep.subr.mxu0 0.0
    %136 = vmatpush1.msra.mxu0 0.0
    %137 = vmatprep.subr.mxu0 0.0
    %138 = vmatpush1.msra.mxu0 0.0
    %139 = vmatprep.subr.mxu0 0.0
    %140 = vmatpush1.msra.mxu0 0.0
    %141 = vmatprep.subr.mxu0 0.0
    %142 = vmatpush1.msra.mxu0 0.0
    %143 = vmatprep.subr.mxu0 0.0
    %144 = vmatpush1.msra.mxu0 0.0
    %145 = vmatprep.subr.mxu0 0.0
    %146 = vmatpush1.msra.mxu0 0.0
    %147 = vmatprep.subr.mxu0 0.0
    %148 = vmatpush1.msra.mxu0 0.0
    %149 = vmatprep.subr.mxu0 0.0
    %150 = vmatpush1.msra.mxu0 0.0
    %151 = vmatprep.subr.mxu0 0.0
    %152 = vmatpush1.msra.mxu0 0.0
    %153 = vmatprep.subr.mxu0 0.0
    %154 = vmatpush1.msra.mxu0 0.0
    %155 = vmatprep.subr.mxu0 0.0
    %156 = vmatpush1.msra.mxu0 0.0
    %157 = vmatprep.subr.mxu0 0.0
    %158 = vmatpush1.msra.mxu0 0.0
    %159 = vmatprep.subr.mxu0 0.0
    %160 = vmatpush1.msra.mxu0 0.0
    %161 = vmatprep.subr.mxu0 0.0
    %162 = vmatpush1.msra.mxu0 0.0
    %163 = vmatprep.subr.mxu0 0.0
    %164 = vmatpush1.msra.mxu0 0.0
    %165 = vmatprep.subr.mxu0 0.0
    %166 = vmatpush1.msra.mxu0 0.0
    %167 = vmatprep.subr.mxu0 0.0
    %168 = vmatpush1.msra.mxu0 0.0
    %169 = vmatprep.subr.mxu0 0.0
    %170 = vmatpush1.msra.mxu0 0.0
    %171 = vmatprep.subr.mxu0 0.0
    %172 = vmatpush1.msra.mxu0 0.0
    %173 = vmatprep.subr.mxu0 0.0
    %174 = vmatpush1.msra.mxu0 0.0
    %175 = vmatprep.subr.mxu0 0.0
    %176 = vmatpush1.msra.mxu0 0.0
    %177 = vmatprep.subr.mxu0 0.0
    %178 = vmatpush1.msra.mxu0 0.0
    %179 = vmatprep.subr.mxu0 0.0
    %180 = vmatpush1.msra.mxu0 0.0
    %181 = vmatprep.mubr.f32.mxu0 0.0
    %182 = vmatmul.mubr.f32.gmra.mrb[0].mxu0 %v45
    %v183 = vpop.f32.mrb[0].mxu0
    %v184 = vadd.f32 %v114, %v183
    %v185 = vpop.f32.mrb[0].mxu0
    %186 = vdwg.mxu0
    %v187 = vmax.f32 %v184, 0.0
    %v188 = vld [vmem:[%s1] sm:$0xff]
    %189 = vset.pattern.permute.xlu0 0
    %190 = vperm.xlu0 %189, %v188
    %v191 = vpop.permute.xlu0 %190
    %vm192 = vcmp.eq.s32.totalorder %v32, %v191
    %v193 = vsel %vm192, 1, 0
    %v194 = vcvt.s32.f32 %v193
    %v195 = vld [vmem:[%s5] sm:$0xff]
    %v196 = vld [vmem:[%s5 + $0x8] sm:$0xff]
    %v197 = vld [vmem:[%s5 + $0x10] sm:$0xff]
    %v198 = vld [vmem:[%s5 + $0x18] sm:$0xff]
    %v199 = vld [vmem:[%s5 + $0x20] sm:$0xff]
    %v200 = vld [vmem:[%s5 + $0x28] sm:$0xff]
    %v201 = vld [vmem:[%s5 + $0x30] sm:$0xff]
    %v202 = vld [vmem:[%s5 + $0x38] sm:$0xff]
    %vm203 = vcmask 261120
    %v205 = vsel %vm203, %v194, 0
    %207 = vmatprep.subr.mxu0 0.0
    %208 = vmatpush1.msra.mxu0 %v199
    %209 = vmatprep.subr.mxu0 0.0
    %210 = vmatpush1.msra.mxu0 %v200
    %211 = vmatprep.subr.mxu0 0.0
    %212 = vmatpush1.msra.mxu0 %v201
    %213 = vmatprep.subr.mxu0 0.0
    %214 = vmatpush1.msra.mxu0 %v202
    %215 = vmatprep.subr.mxu0 0.0
    %216 = vmatpush1.msra.mxu0 0.0
    %217 = vmatprep.subr.mxu0 0.0
    %218 = vmatpush1.msra.mxu0 0.0
    %219 = vmatprep.subr.mxu0 0.0
    %220 = vmatpush1.msra.mxu0 0.0
    %221 = vmatprep.subr.mxu0 0.0
    %222 = vmatpush1.msra.mxu0 0.0
    %223 = vmatprep.subr.mxu0 0.0
    %224 = vmatpush1.msra.mxu0 0.0
    %225 = vmatprep.subr.mxu0 0.0
    %226 = vmatpush1.msra.mxu0 0.0
    %227 = vmatprep.subr.mxu0 0.0
    %228 = vmatpush1.msra.mxu0 0.0
    %229 = vmatprep.subr.mxu0 0.0
    %230 = vmatpush1.msra.mxu0 0.0
    %231 = vmatprep.subr.mxu0 0.0
    %232 = vmatpush1.msra.mxu0 0.0
    %233 = vmatprep.subr.mxu0 0.0
    %234 = vmatpush1.msra.mxu0 0.0
    %235 = vmatprep.subr.mxu0 0.0
    %236 = vmatpush1.msra.mxu0 0.0
    %237 = vmatprep.subr.mxu0 0.0
    %238 = vmatpush1.msra.mxu0 0.0
    %239 = vmatprep.subr.mxu0 0.0
    %240 = vmatpush1.msra.mxu0 0.0
    %241 = vmatprep.subr.mxu0 0.0
    %242 = vmatpush1.msra.mxu0 0.0
    %243 = vmatprep.subr.mxu0 0.0
    %244 = vmatpush1.msra.mxu0 0.0
    %245 = vmatprep.subr.mxu0 0.0
    %246 = vmatpush1.msra.mxu0 0.0
    %247 = vmatprep.subr.mxu0 0.0
    %248 = vmatpush1.msra.mxu0 0.0
    %249 = vmatprep.subr.mxu0 0.0
    %250 = vmatpush1.msra.mxu0 0.0
    %251 = vmatprep.subr.mxu0 0.0
    %252 = vmatpush1.msra.mxu0 0.0
    %253 = vmatprep.subr.mxu0 0.0
    %254 = vmatpush1.msra.mxu0 0.0
    %255 = vmatprep.subr.mxu0 0.0
    %256 = vmatpush1.msra.mxu0 0.0
    %257 = vmatprep.subr.mxu0 0.0
    %258 = vmatpush1.msra.mxu0 0.0
    %259 = vmatprep.subr.mxu0 0.0
    %260 = vmatpush1.msra.mxu0 0.0
    %261 = vmatprep.subr.mxu0 0.0
    %262 = vmatpush1.msra.mxu0 0.0
    %263 = vmatprep.subr.mxu0 0.0
    %264 = vmatpush1.msra.mxu0 0.0
    %265 = vmatprep.subr.mxu0 0.0
    %266 = vmatpush1.msra.mxu0 0.0
    %267 = vmatprep.subr.mxu0 0.0
    %268 = vmatpush1.msra.mxu0 0.0
    %269 = vmatprep.subr.mxu0 0.0
    %270 = vmatpush1.msra.mxu0 0.0
    %271 = vmatprep.mubr.f32.mxu0 0.0
    %272 = vmatmul.mubr.f32.gmra.mrb[0].mxu0 %v205
    %v273 = vpop.f32.mrb[0].mxu0
    %v274 = vadd.f32 0.0, %v273
    %v275 = vpop.f32.mrb[0].mxu0
    %276 = vdwg.mxu0
    %277 = vmatprep.subr.mxu0 0.0
    %278 = vmatpush1.msra.mxu0 %v195
    %279 = vmatprep.subr.mxu0 0.0
    %280 = vmatpush1.msra.mxu0 %v196
    %281 = vmatprep.subr.mxu0 0.0
    %282 = vmatpush1.msra.mxu0 %v197
    %283 = vmatprep.subr.mxu0 0.0
    %284 = vmatpush1.msra.mxu0 %v198
    %285 = vmatprep.subr.mxu0 0.0
    %286 = vmatpush1.msra.mxu0 0.0
    %287 = vmatprep.subr.mxu0 0.0
    %288 = vmatpush1.msra.mxu0 0.0
    %289 = vmatprep.subr.mxu0 0.0
    %290 = vmatpush1.msra.mxu0 0.0
    %291 = vmatprep.subr.mxu0 0.0
    %292 = vmatpush1.msra.mxu0 0.0
    %293 = vmatprep.subr.mxu0 0.0
    %294 = vmatpush1.msra.mxu0 0.0
    %295 = vmatprep.subr.mxu0 0.0
    %296 = vmatpush1.msra.mxu0 0.0
    %297 = vmatprep.subr.mxu0 0.0
    %298 = vmatpush1.msra.mxu0 0.0
    %299 = vmatprep.subr.mxu0 0.0
    %300 = vmatpush1.msra.mxu0 0.0
    %301 = vmatprep.subr.mxu0 0.0
    %302 = vmatpush1.msra.mxu0 0.0
    %303 = vmatprep.subr.mxu0 0.0
    %304 = vmatpush1.msra.mxu0 0.0
    %305 = vmatprep.subr.mxu0 0.0
    %306 = vmatpush1.msra.mxu0 0.0
    %307 = vmatprep.subr.mxu0 0.0
    %308 = vmatpush1.msra.mxu0 0.0
    %309 = vmatprep.subr.mxu0 0.0
    %310 = vmatpush1.msra.mxu0 0.0
    %311 = vmatprep.subr.mxu0 0.0
    %312 = vmatpush1.msra.mxu0 0.0
    %313 = vmatprep.subr.mxu0 0.0
    %314 = vmatpush1.msra.mxu0 0.0
    %315 = vmatprep.subr.mxu0 0.0
    %316 = vmatpush1.msra.mxu0 0.0
    %317 = vmatprep.subr.mxu0 0.0
    %318 = vmatpush1.msra.mxu0 0.0
    %319 = vmatprep.subr.mxu0 0.0
    %320 = vmatpush1.msra.mxu0 0.0
    %321 = vmatprep.subr.mxu0 0.0
    %322 = vmatpush1.msra.mxu0 0.0
    %323 = vmatprep.subr.mxu0 0.0
    %324 = vmatpush1.msra.mxu0 0.0
    %325 = vmatprep.subr.mxu0 0.0
    %326 = vmatpush1.msra.mxu0 0.0
    %327 = vmatprep.subr.mxu0 0.0
    %328 = vmatpush1.msra.mxu0 0.0
    %329 = vmatprep.subr.mxu0 0.0
    %330 = vmatpush1.msra.mxu0 0.0
    %331 = vmatprep.subr.mxu0 0.0
    %332 = vmatpush1.msra.mxu0 0.0
    %333 = vmatprep.subr.mxu0 0.0
    %334 = vmatpush1.msra.mxu0 0.0
    %335 = vmatprep.subr.mxu0 0.0
    %336 = vmatpush1.msra.mxu0 0.0
    %337 = vmatprep.subr.mxu0 0.0
    %338 = vmatpush1.msra.mxu0 0.0
    %339 = vmatprep.subr.mxu0 0.0
    %340 = vmatpush1.msra.mxu0 0.0
    %341 = vmatprep.mubr.f32.mxu0 0.0
    %342 = vmatmul.mubr.f32.gmra.mrb[0].mxu0 %v205
    %v343 = vpop.f32.mrb[0].mxu0
    %v344 = vadd.f32 %v274, %v343
    %v345 = vpop.f32.mrb[0].mxu0
    %346 = vdwg.mxu0
    %v347 = vmax.f32 %v344, 0.0
    %v348 = vld [vmem:[%s2] sm:$0xff]
    %349 = vset.pattern.permute.xlu0 0
    %350 = vperm.xlu0 %349, %v348
    %v351 = vpop.permute.xlu0 %350
    %vm352 = vcmp.eq.s32.totalorder %v32, %v351
    %v353 = vsel %vm352, 1, 0
    %v354 = vcvt.s32.f32 %v353
    %v355 = vld [vmem:[%s6] sm:$0xff]
    %v356 = vld [vmem:[%s6 + $0x8] sm:$0xff]
    %v357 = vld [vmem:[%s6 + $0x10] sm:$0xff]
    %v358 = vld [vmem:[%s6 + $0x18] sm:$0xff]
    %v360 = vsel %vm43, %v354, 0
    %362 = vmatprep.subr.mxu0 0.0
    %363 = vmatpush1.msra.mxu0 %v357
    %364 = vmatprep.subr.mxu0 0.0
    %365 = vmatpush1.msra.mxu0 %v358
    %366 = vmatprep.subr.mxu0 0.0
    %367 = vmatpush1.msra.mxu0 0.0
    %368 = vmatprep.subr.mxu0 0.0
    %369 = vmatpush1.msra.mxu0 0.0
    %370 = vmatprep.subr.mxu0 0.0
    %371 = vmatpush1.msra.mxu0 0.0
    %372 = vmatprep.subr.mxu0 0.0
    %373 = vmatpush1.msra.mxu0 0.0
    %374 = vmatprep.subr.mxu0 0.0
    %375 = vmatpush1.msra.mxu0 0.0
    %376 = vmatprep.subr.mxu0 0.0
    %377 = vmatpush1.msra.mxu0 0.0
    %378 = vmatprep.subr.mxu0 0.0
    %379 = vmatpush1.msra.mxu0 0.0
    %380 = vmatprep.subr.mxu0 0.0
    %381 = vmatpush1.msra.mxu0 0.0
    %382 = vmatprep.subr.mxu0 0.0
    %383 = vmatpush1.msra.mxu0 0.0
    %384 = vmatprep.subr.mxu0 0.0
    %385 = vmatpush1.msra.mxu0 0.0
    %386 = vmatprep.subr.mxu0 0.0
    %387 = vmatpush1.msra.mxu0 0.0
    %388 = vmatprep.subr.mxu0 0.0
    %389 = vmatpush1.msra.mxu0 0.0
    %390 = vmatprep.subr.mxu0 0.0
    %391 = vmatpush1.msra.mxu0 0.0
    %392 = vmatprep.subr.mxu0 0.0
    %393 = vmatpush1.msra.mxu0 0.0
    %394 = vmatprep.subr.mxu0 0.0
    %395 = vmatpush1.msra.mxu0 0.0
    %396 = vmatprep.subr.mxu0 0.0
    %397 = vmatpush1.msra.mxu0 0.0
    %398 = vmatprep.subr.mxu0 0.0
    %399 = vmatpush1.msra.mxu0 0.0
    %400 = vmatprep.subr.mxu0 0.0
    %401 = vmatpush1.msra.mxu0 0.0
    %402 = vmatprep.subr.mxu0 0.0
    %403 = vmatpush1.msra.mxu0 0.0
    %404 = vmatprep.subr.mxu0 0.0
    %405 = vmatpush1.msra.mxu0 0.0
    %406 = vmatprep.subr.mxu0 0.0
    %407 = vmatpush1.msra.mxu0 0.0
    %408 = vmatprep.subr.mxu0 0.0
    %409 = vmatpush1.msra.mxu0 0.0
    %410 = vmatprep.subr.mxu0 0.0
    %411 = vmatpush1.msra.mxu0 0.0
    %412 = vmatprep.subr.mxu0 0.0
    %413 = vmatpush1.msra.mxu0 0.0
    %414 = vmatprep.subr.mxu0 0.0
    %415 = vmatpush1.msra.mxu0 0.0
    %416 = vmatprep.subr.mxu0 0.0
    %417 = vmatpush1.msra.mxu0 0.0
    %418 = vmatprep.subr.mxu0 0.0
    %419 = vmatpush1.msra.mxu0 0.0
    %420 = vmatprep.subr.mxu0 0.0
    %421 = vmatpush1.msra.mxu0 0.0
    %422 = vmatprep.subr.mxu0 0.0
    %423 = vmatpush1.msra.mxu0 0.0
    %424 = vmatprep.subr.mxu0 0.0
    %425 = vmatpush1.msra.mxu0 0.0
    %426 = vmatprep.mubr.f32.mxu0 0.0
    %427 = vmatmul.mubr.f32.gmra.mrb[0].mxu0 %v360
    %v428 = vpop.f32.mrb[0].mxu0
    %v429 = vadd.f32 0.0, %v428
    %v430 = vpop.f32.mrb[0].mxu0
    %431 = vdwg.mxu0
    %432 = vmatprep.subr.mxu0 0.0
    %433 = vmatpush1.msra.mxu0 %v355
    %434 = vmatprep.subr.mxu0 0.0
    %435 = vmatpush1.msra.mxu0 %v356
    %436 = vmatprep.subr.mxu0 0.0
    %437 = vmatpush1.msra.mxu0 0.0
    %438 = vmatprep.subr.mxu0 0.0
    %439 = vmatpush1.msra.mxu0 0.0
    %440 = vmatprep.subr.mxu0 0.0
    %441 = vmatpush1.msra.mxu0 0.0
    %442 = vmatprep.subr.mxu0 0.0
    %443 = vmatpush1.msra.mxu0 0.0
    %444 = vmatprep.subr.mxu0 0.0
    %445 = vmatpush1.msra.mxu0 0.0
    %446 = vmatprep.subr.mxu0 0.0
    %447 = vmatpush1.msra.mxu0 0.0
    %448 = vmatprep.subr.mxu0 0.0
    %449 = vmatpush1.msra.mxu0 0.0
    %450 = vmatprep.subr.mxu0 0.0
    %451 = vmatpush1.msra.mxu0 0.0
    %452 = vmatprep.subr.mxu0 0.0
    %453 = vmatpush1.msra.mxu0 0.0
    %454 = vmatprep.subr.mxu0 0.0
    %455 = vmatpush1.msra.mxu0 0.0
    %456 = vmatprep.subr.mxu0 0.0
    %457 = vmatpush1.msra.mxu0 0.0
    %458 = vmatprep.subr.mxu0 0.0
    %459 = vmatpush1.msra.mxu0 0.0
    %460 = vmatprep.subr.mxu0 0.0
    %461 = vmatpush1.msra.mxu0 0.0
    %462 = vmatprep.subr.mxu0 0.0
    %463 = vmatpush1.msra.mxu0 0.0
    %464 = vmatprep.subr.mxu0 0.0
    %465 = vmatpush1.msra.mxu0 0.0
    %466 = vmatprep.subr.mxu0 0.0
    %467 = vmatpush1.msra.mxu0 0.0
    %468 = vmatprep.subr.mxu0 0.0
    %469 = vmatpush1.msra.mxu0 0.0
    %470 = vmatprep.subr.mxu0 0.0
    %471 = vmatpush1.msra.mxu0 0.0
    %472 = vmatprep.subr.mxu0 0.0
    %473 = vmatpush1.msra.mxu0 0.0
    %474 = vmatprep.subr.mxu0 0.0
    %475 = vmatpush1.msra.mxu0 0.0
    %476 = vmatprep.subr.mxu0 0.0
    %477 = vmatpush1.msra.mxu0 0.0
    %478 = vmatprep.subr.mxu0 0.0
    %479 = vmatpush1.msra.mxu0 0.0
    %480 = vmatprep.subr.mxu0 0.0
    %481 = vmatpush1.msra.mxu0 0.0
    %482 = vmatprep.subr.mxu0 0.0
    %483 = vmatpush1.msra.mxu0 0.0
    %484 = vmatprep.subr.mxu0 0.0
    %485 = vmatpush1.msra.mxu0 0.0
    %486 = vmatprep.subr.mxu0 0.0
    %487 = vmatpush1.msra.mxu0 0.0
    %488 = vmatprep.subr.mxu0 0.0
    %489 = vmatpush1.msra.mxu0 0.0
    %490 = vmatprep.subr.mxu0 0.0
    %491 = vmatpush1.msra.mxu0 0.0
    %492 = vmatprep.subr.mxu0 0.0
    %493 = vmatpush1.msra.mxu0 0.0
    %494 = vmatprep.subr.mxu0 0.0
    %495 = vmatpush1.msra.mxu0 0.0
    %496 = vmatprep.mubr.f32.mxu0 0.0
    %497 = vmatmul.mubr.f32.gmra.mrb[0].mxu0 %v360
    %v498 = vpop.f32.mrb[0].mxu0
    %v499 = vadd.f32 %v429, %v498
    %v500 = vpop.f32.mrb[0].mxu0
    %501 = vdwg.mxu0
    %v502 = vmax.f32 %v499, 0.0
    %v503 = vld [vmem:[%s7] sm:$0x1]
    %v504 = vld [vmem:[%s7 + $0x1] sm:$0x1]
    %505 = vadd.xlane.f32.xlu0 %v187
    %v506 = vpop.xlane.xlu0 %505
    %v507 = vrcp.pop 128.0
    %v508 = vmul.f32 %v506, %v507
    %v509 = vmul.f32 %v187, %v187
    %510 = vadd.xlane.f32.xlu0 %v509
    %v511 = vpop.xlane.xlu0 %510
    %v512 = vmul.f32 %v511, %v507
    %v513 = vmul.f32 %v508, %v508
    %v514 = vsub.f32 %v512, %v513
    %v515 = vsub.f32 %v187, %v508
    %v516 = vadd.f32 %v514, 1e-05
    %v517 = vrsqrt.pop %v516
    %v518 = vmul.f32 %v515, %v517
    %v519 = vlaneseq
    %v520 = vshrl.u32 %v519, 7
    %v521 = vsub.s32 0, %v520
    %v522 = vrot.slane %v503, %v521
    %v523 = vmul.f32 %v518, %v522
    %v524 = vlaneseq
    %v525 = vshrl.u32 %v524, 7
    %v526 = vsub.s32 0, %v525
    %v527 = vrot.slane %v504, %v526
    %v528 = vadd.f32 %v523, %v527
    %v529 = vld [vmem:[%s7 + $0x2] sm:$0x1]
    %v530 = vld [vmem:[%s7 + $0x3] sm:$0x1]
    %531 = vadd.xlane.f32.xlu0 %v347
    %v532 = vpop.xlane.xlu0 %531
    %v533 = vmul.f32 %v532, %v507
    %v534 = vmul.f32 %v347, %v347
    %535 = vadd.xlane.f32.xlu0 %v534
    %v536 = vpop.xlane.xlu0 %535
    %v537 = vmul.f32 %v536, %v507
    %v538 = vmul.f32 %v533, %v533
    %v539 = vsub.f32 %v537, %v538
    %v540 = vsub.f32 %v347, %v533
    %v541 = vadd.f32 %v539, 1e-05
    %v542 = vrsqrt.pop %v541
    %v543 = vmul.f32 %v540, %v542
    %v544 = vlaneseq
    %v545 = vshrl.u32 %v544, 7
    %v546 = vsub.s32 0, %v545
    %v547 = vrot.slane %v529, %v546
    %v548 = vmul.f32 %v543, %v547
    %v549 = vlaneseq
    %v550 = vshrl.u32 %v549, 7
    %v551 = vsub.s32 0, %v550
    %v552 = vrot.slane %v530, %v551
    %v553 = vadd.f32 %v548, %v552
    %v554 = vld [vmem:[%s7 + $0x4] sm:$0x1]
    %v555 = vld [vmem:[%s7 + $0x5] sm:$0x1]
    %556 = vadd.xlane.f32.xlu0 %v502
    %v557 = vpop.xlane.xlu0 %556
    %v558 = vmul.f32 %v557, %v507
    %v559 = vmul.f32 %v502, %v502
    %560 = vadd.xlane.f32.xlu0 %v559
    %v561 = vpop.xlane.xlu0 %560
    %v562 = vmul.f32 %v561, %v507
    %v563 = vmul.f32 %v558, %v558
    %v564 = vsub.f32 %v562, %v563
    %v565 = vsub.f32 %v502, %v558
    %v566 = vadd.f32 %v564, 1e-05
    %v567 = vrsqrt.pop %v566
    %v568 = vmul.f32 %v565, %v567
    %v569 = vlaneseq
    %v570 = vshrl.u32 %v569, 7
    %v571 = vsub.s32 0, %v570
    %v572 = vrot.slane %v554, %v571
    %v573 = vmul.f32 %v568, %v572
    %v574 = vlaneseq
    %v575 = vshrl.u32 %v574, 7
    %v576 = vsub.s32 0, %v575
    %v577 = vrot.slane %v555, %v576
    %v578 = vadd.f32 %v573, %v577
    %v579 = vmul.f32 %v553, %v578
    %v580 = vmul.f32 %v528, %v579
    %581 = vadd.xlane.f32.xlu0 %v580
    %v582 = vpop.xlane.xlu0 %581
    %583 = vxpose.xlu0.b32.start [1/16] %v582, 128
    %584 = vxpose.xlu0.b32.cont [2/16] 0.0, 128
    %585 = vxpose.xlu0.b32.cont [3/16] 0.0, 128
    %586 = vxpose.xlu0.b32.cont [4/16] 0.0, 128
    %587 = vxpose.xlu0.b32.cont [5/16] 0.0, 128
    %588 = vxpose.xlu0.b32.cont [6/16] 0.0, 128
    %589 = vxpose.xlu0.b32.cont [7/16] 0.0, 128
    %590 = vxpose.xlu0.b32.cont [8/16] 0.0, 128
    %591 = vxpose.xlu0.b32.cont [9/16] 0.0, 128
    %592 = vxpose.xlu0.b32.cont [10/16] 0.0, 128
    %593 = vxpose.xlu0.b32.cont [11/16] 0.0, 128
    %594 = vxpose.xlu0.b32.cont [12/16] 0.0, 128
    %595 = vxpose.xlu0.b32.cont [13/16] 0.0, 128
    %596 = vxpose.xlu0.b32.cont [14/16] 0.0, 128
    %597 = vxpose.xlu0.b32.cont [15/16] 0.0, 128
    %598 = vxpose.xlu0.b32.end [16/16] 0.0, 128
    %v599 = vpop.trf.xlu0
    %v600 = vpop.trf.xlu0
    %v601 = vpop.trf.xlu0
    %v602 = vpop.trf.xlu0
    %v603 = vpop.trf.xlu0
    %v604 = vpop.trf.xlu0
    %v605 = vpop.trf.xlu0
    %v606 = vpop.trf.xlu0
    %v607 = vpop.trf.xlu0
    %v608 = vpop.trf.xlu0
    %v609 = vpop.trf.xlu0
    %v610 = vpop.trf.xlu0
    %v611 = vpop.trf.xlu0
    %v612 = vpop.trf.xlu0
    %v613 = vpop.trf.xlu0
    %v614 = vpop.trf.xlu0
    %v615 = vld [vmem:[%s3] sm:$0x1]
    %v616 = vadd.f32 %v599, %v615
    %v617 = vmax.f32 %v616, -0.1
    %v618 = vmin.f32 %v617, 1.1
    %vm619 = vcmask 57344
    %620 = vst.msk [vmem:[#allocation2] sm:$0x1] %vm619, %v618
    // Predicated region
    $region34: #{matrix_fact_forward.1} parent=1 // pred_check
      _
    $region35: #{matrix_fact_forward.1} parent=1 // pred_check_branch
      %622 = sbr.rel (0) target = $region37
    $region36: #{matrix_fact_forward.1} parent=1 // pred_region
      %s624 = ssub.s32 16, 16
      %625 = vsyncadd [#allocation3], %s624
      %s627 = sshll.u32 [#allocation2], 4
      %s628 = int_to_ptr.vmem [resolvable:$true] %s627
      %630 = dma.vmem_to_hbm [thread:$0]  %s628, 16, %s8, [#allocation3]
    $region37: #{matrix_fact_forward.1} parent=1 // pred_fallthru
      _
    // Predicated region
    $region38: #{matrix_fact_forward.1} parent=1 // pred_check
      _
    $region39: #{matrix_fact_forward.1} parent=1 // pred_check_branch
      %632 = sbr.rel (0) target = $region41
    $region40: #{matrix_fact_forward.1} parent=1 // pred_region
      %633 = dma.done [#allocation3], 16
    $region41: #{matrix_fact_forward.1} parent=1 // pred_fallthru
      _
    %634 = vsyncpa [#allocation3], 1

</llo_original>
